<compile_context>
chip_gen: v7x
topology: tpu7x:2x2x1
jax: 0.10.0
libtpu: 0.0.40
codegen_flags: <defaults>
</compile_context>

<pallas_src>
import jax
import jax.numpy as jnp
from jax.experimental import pallas as pl
from jax.experimental.pallas import tpu as pltpu


def _make_mlp_kernel(n_layers, activation, matmul_dtype):
    """Fused feature-major MLP kernel: all layers in a single pallas_call body."""

    def kernel(x_ref, *refs):
        # refs layout: w0, b0, w1, b1, ..., w_{L-1}, b_{L-1}, out_ref
        out_ref = refs[-1]
        wb = refs[:-1]
        h = x_ref[...]                           # (d_in, tile_b), batch on lanes
        for i in range(n_layers):
            w = wb[2 * i][...]                   # (d_out_i, d_in_i)  PyTorch layout
            b = wb[2 * i + 1][...]               # (d_out_i, 1)
            if matmul_dtype is not None:
                w_mm = w.astype(matmul_dtype)
                h_mm = h.astype(matmul_dtype)
            else:
                w_mm, h_mm = w, h
            # MXU matmul with f32 accumulation; bias add / activation in f32.
            h = jnp.dot(w_mm, h_mm, preferred_element_type=jnp.float32) + b
            if i != n_layers - 1:
                h = activation(h)
                # dropout: identity (inference mode)
        out_ref[...] = h.astype(out_ref.dtype)

    return kernel


def _pick_tile_b(batch, max_tile=512):
    """Largest lane-aligned (multiple of 128) tile that divides the batch;
    otherwise fall back to the whole batch as one block (valid because a block
    dim equal to the full array dim satisfies the (8,128) rule)."""
    for cand in range(max_tile, 0, -128):
        if batch % cand == 0:
            return cand
    return batch


def aecoder_forward(x, weights, biases, *, activation=jnp.tanh, matmul_dtype=None):
    """Run the AECoder MLP forward.

    x:        (B, layer_arch[0]) float32
    weights:  list of (layer_arch[i+1], layer_arch[i]) arrays — PyTorch (out, in)
              layout, NOT transposed.
    biases:   list of (layer_arch[i+1],) arrays
    activation: elementwise callable applied between layers (default tanh).
    matmul_dtype: optional dtype (e.g. jnp.bfloat16) for the MXU operands; the
              accumulation, bias add and activation stay in float32.
    """
    n_layers = len(weights)
    B, d_in = x.shape
    d_out = weights[-1].shape[0]

    # Feature-major layout: transpose x once here so the batch sits on lanes.
    x_t = jnp.transpose(x)                         # (d_in, B)
    biases_col = [b.reshape(-1, 1) for b in biases]  # (d_out_i, 1) lane-broadcast cols

    tile_b = _pick_tile_b(B)
    n_tiles = B // tile_b

    kernel = _make_mlp_kernel(n_layers, activation, matmul_dtype)

    in_specs = [pl.BlockSpec((d_in, tile_b), lambda i: (0, i))]
    args = [x_t]
    for w, b in zip(weights, biases_col):
        # Constant index_map -> weights/biases fetched once, VMEM-resident
        # across every grid step.
        in_specs.append(pl.BlockSpec(w.shape, lambda i: (0, 0)))
        in_specs.append(pl.BlockSpec(b.shape, lambda i: (0, 0)))
        args.append(w)
        args.append(b)

    out_spec = pl.BlockSpec((d_out, tile_b), lambda i: (0, i))

    itemsize = jnp.dtype(x.dtype).itemsize
    flops = 2 * B * sum(int(w.shape[0]) * int(w.shape[1]) for w in weights)
    transcendentals = B * sum(int(w.shape[0]) for w in weights[:-1])
    bytes_accessed = itemsize * (
        int(x.size) + B * d_out
        + sum(int(w.size) + int(b.size) for w, b in zip(weights, biases)))

    fn = pl.pallas_call(
        kernel,
        out_shape=jax.ShapeDtypeStruct((d_out, B), x.dtype),
        grid=(n_tiles,),
        in_specs=in_specs,
        out_specs=out_spec,
        compiler_params=pltpu.CompilerParams(
            dimension_semantics=("parallel",)),
        cost_estimate=pl.CostEstimate(
            flops=flops,
            transcendentals=transcendentals,
            bytes_accessed=bytes_accessed),
    )
    out_t = fn(*args)                              # (d_out, B)
    return jnp.transpose(out_t)                    # (B, d_out)


def reference_forward(x, weights, biases, activation=jnp.tanh):
    h = x
    for i, (w, b) in enumerate(zip(weights, biases)):
        h = h @ w.T + b                            # PyTorch (out, in) layout
        if i != len(weights) - 1:
            h = activation(h)
    return h


if __name__ == "__main__":
    # layer_arch like a small Koopman encoder: input 16 -> hidden 32 -> 32 -> latent 8
    layer_arch = [16, 32, 32, 8]
    batch = 256          # lane-aligned batch: exercises the tiled (grid=(2,)) path

    key = jax.random.PRNGKey(0)
    key, kx = jax.random.split(key)
    x = jax.random.normal(kx, (batch, layer_arch[0]), dtype=jnp.float32)

    weights = []
    biases = []
    for i in range(len(layer_arch) - 1):
        key, kw, kb = jax.random.split(key, 3)
        fan_in, fan_out = layer_arch[i], layer_arch[i + 1]
        bound = 1.0 / (fan_in ** 0.5)  # matches torch.nn.Linear uniform bound
        # stored in PyTorch (out, in) layout — no transpose needed anymore
        w = jax.random.uniform(kw, (fan_out, fan_in), jnp.float32, -bound, bound)
        b = jax.random.uniform(kb, (fan_out,), jnp.float32, -bound, bound)
        weights.append(w)
        biases.append(b)

    # 1) f32 path, tiled batch grid.
    out = aecoder_forward(x, weights, biases)
    out = jax.block_until_ready(out)
    ref = reference_forward(x, weights, biases)
    assert out.shape == (batch, layer_arch[-1])
    assert jnp.allclose(out, ref, atol=1e-5, rtol=1e-5), "f32 mismatch vs reference"

    # 2) bf16-matmul path (f32 accumulation) — recommended on v6e/v7x.
    out_bf16 = jax.block_until_ready(
        aecoder_forward(x, weights, biases, matmul_dtype=jnp.bfloat16))
    assert float(jnp.max(jnp.abs(out_bf16 - ref))) < 0.15, "bf16 matmul path diverged"

    # 3) Tiny-batch fallback (single full-array block, grid=(1,)).
    x_small = x[:8]
    out_small = jax.block_until_ready(aecoder_forward(x_small, weights, biases))
    assert jnp.allclose(out_small, reference_forward(x_small, weights, biases),
                        atol=1e-5, rtol=1e-5), "small-batch mismatch vs reference"

    print("KERNEL_OK")
</pallas_src>

<mosaic_0001>
module attributes {stable_mosaic.version = 11 : i64} {
  func.func @kernel(%arg0: i32, %arg1: memref<16x256xf32, #tpu.memory_space<vmem>>, %arg2: memref<32x16xf32, #tpu.memory_space<vmem>>, %arg3: memref<32x1xf32, #tpu.memory_space<vmem>>, %arg4: memref<32x32xf32, #tpu.memory_space<vmem>>, %arg5: memref<32x1xf32, #tpu.memory_space<vmem>>, %arg6: memref<8x32xf32, #tpu.memory_space<vmem>>, %arg7: memref<8x1xf32, #tpu.memory_space<vmem>>, %arg8: memref<8x256xf32, #tpu.memory_space<vmem>>) attributes {dimension_semantics = [#tpu.dimension_semantics<parallel>], iteration_bounds = array<i64: 1>, scalar_prefetch = 0 : i64, scratch_operands = 0 : i64, tpu.core_type = #tpu.core_type<tc>, window_params = [{transform_indices = @transform_0, window_bounds = array<i64: 16, 256>}, {pipeline_mode = #tpu.pipeline_mode<synchronous>, transform_indices = @transform_1, window_bounds = array<i64: 32, 16>}, {pipeline_mode = #tpu.pipeline_mode<synchronous>, transform_indices = @transform_2, window_bounds = array<i64: 32, 1>}, {pipeline_mode = #tpu.pipeline_mode<synchronous>, transform_indices = @transform_3, window_bounds = array<i64: 32, 32>}, {pipeline_mode = #tpu.pipeline_mode<synchronous>, transform_indices = @transform_4, window_bounds = array<i64: 32, 1>}, {pipeline_mode = #tpu.pipeline_mode<synchronous>, transform_indices = @transform_5, window_bounds = array<i64: 8, 32>}, {pipeline_mode = #tpu.pipeline_mode<synchronous>, transform_indices = @transform_6, window_bounds = array<i64: 8, 1>}, {transform_indices = @transform_7, window_bounds = array<i64: 8, 256>}]} {
    %c0 = arith.constant 0 : index
    %c0_0 = arith.constant 0 : index
    %0 = vector.load %arg1[%c0, %c0_0] : memref<16x256xf32, #tpu.memory_space<vmem>>, vector<16x256xf32>
    %c0_1 = arith.constant 0 : index
    %c0_2 = arith.constant 0 : index
    %1 = vector.load %arg2[%c0_1, %c0_2] : memref<32x16xf32, #tpu.memory_space<vmem>>, vector<32x16xf32>
    %c0_3 = arith.constant 0 : index
    %c0_4 = arith.constant 0 : index
    %2 = vector.load %arg3[%c0_3, %c0_4] : memref<32x1xf32, #tpu.memory_space<vmem>>, vector<32x1xf32>
    %cst = arith.constant dense<0.000000e+00> : vector<32x256xf32>
    %3 = tpu.matmul %1, %0, %cst {dimension_numbers = #tpu.dot_dimension_numbers<[1], [0], [0], [1], [0, 0, 1, 1], [], []>} : vector<32x16xf32>, vector<16x256xf32>, vector<32x256xf32> -> vector<32x256xf32>
    %4 = vector.broadcast %2 : vector<32x1xf32> to vector<32x256xf32>
    %5 = arith.addf %3, %4 : vector<32x256xf32>
    %6 = math.tanh %5 : vector<32x256xf32>
    %c0_5 = arith.constant 0 : index
    %c0_6 = arith.constant 0 : index
    %7 = vector.load %arg4[%c0_5, %c0_6] : memref<32x32xf32, #tpu.memory_space<vmem>>, vector<32x32xf32>
    %c0_7 = arith.constant 0 : index
    %c0_8 = arith.constant 0 : index
    %8 = vector.load %arg5[%c0_7, %c0_8] : memref<32x1xf32, #tpu.memory_space<vmem>>, vector<32x1xf32>
    %cst_9 = arith.constant dense<0.000000e+00> : vector<32x256xf32>
    %9 = tpu.matmul %7, %6, %cst_9 {dimension_numbers = #tpu.dot_dimension_numbers<[1], [0], [0], [1], [0, 0, 1, 1], [], []>} : vector<32x32xf32>, vector<32x256xf32>, vector<32x256xf32> -> vector<32x256xf32>
    %10 = vector.broadcast %8 : vector<32x1xf32> to vector<32x256xf32>
    %11 = arith.addf %9, %10 : vector<32x256xf32>
    %12 = math.tanh %11 : vector<32x256xf32>
    %c0_10 = arith.constant 0 : index
    %c0_11 = arith.constant 0 : index
    %13 = vector.load %arg6[%c0_10, %c0_11] : memref<8x32xf32, #tpu.memory_space<vmem>>, vector<8x32xf32>
    %c0_12 = arith.constant 0 : index
    %c0_13 = arith.constant 0 : index
    %14 = vector.load %arg7[%c0_12, %c0_13] : memref<8x1xf32, #tpu.memory_space<vmem>>, vector<8x1xf32>
    %cst_14 = arith.constant dense<0.000000e+00> : vector<8x256xf32>
    %15 = tpu.matmul %13, %12, %cst_14 {dimension_numbers = #tpu.dot_dimension_numbers<[1], [0], [0], [1], [0, 0, 1, 1], [], []>} : vector<8x32xf32>, vector<32x256xf32>, vector<8x256xf32> -> vector<8x256xf32>
    %16 = vector.broadcast %14 : vector<8x1xf32> to vector<8x256xf32>
    %17 = arith.addf %15, %16 : vector<8x256xf32>
    %c0_15 = arith.constant 0 : index
    %c0_16 = arith.constant 0 : index
    %18 = vector.load %arg8[%c0_15, %c0_16] : memref<8x256xf32, #tpu.memory_space<vmem>>, vector<8x256xf32>
    tpu.vector_store %arg8[%c0_15, %c0_16], %17 {strides = array<i32>} : memref<8x256xf32, #tpu.memory_space<vmem>>, vector<8x256xf32>,
    return
  }
  func.func @transform_0(%arg0: i32) -> (i32, i32) {
    %c0_i32 = arith.constant 0 : i32
    %c0_i32_0 = arith.constant 0 : i32
    return %c0_i32, %arg0 : i32, i32
  }
  func.func @transform_1(%arg0: i32) -> (i32, i32) {
    %c0_i32 = arith.constant 0 : i32
    %c0_i32_0 = arith.constant 0 : i32
    %c0_i32_1 = arith.constant 0 : i32
    return %c0_i32, %c0_i32_0 : i32, i32
  }
  func.func @transform_2(%arg0: i32) -> (i32, i32) {
    %c0_i32 = arith.constant 0 : i32
    %c0_i32_0 = arith.constant 0 : i32
    %c0_i32_1 = arith.constant 0 : i32
    return %c0_i32, %c0_i32_0 : i32, i32
  }
  func.func @transform_3(%arg0: i32) -> (i32, i32) {
    %c0_i32 = arith.constant 0 : i32
    %c0_i32_0 = arith.constant 0 : i32
    %c0_i32_1 = arith.constant 0 : i32
    return %c0_i32, %c0_i32_0 : i32, i32
  }
  func.func @transform_4(%arg0: i32) -> (i32, i32) {
    %c0_i32 = arith.constant 0 : i32
    %c0_i32_0 = arith.constant 0 : i32
    %c0_i32_1 = arith.constant 0 : i32
    return %c0_i32, %c0_i32_0 : i32, i32
  }
  func.func @transform_5(%arg0: i32) -> (i32, i32) {
    %c0_i32 = arith.constant 0 : i32
    %c0_i32_0 = arith.constant 0 : i32
    %c0_i32_1 = arith.constant 0 : i32
    return %c0_i32, %c0_i32_0 : i32, i32
  }
  func.func @transform_6(%arg0: i32) -> (i32, i32) {
    %c0_i32 = arith.constant 0 : i32
    %c0_i32_0 = arith.constant 0 : i32
    %c0_i32_1 = arith.constant 0 : i32
    return %c0_i32, %c0_i32_0 : i32, i32
  }
  func.func @transform_7(%arg0: i32) -> (i32, i32) {
    %c0_i32 = arith.constant 0 : i32
    %c0_i32_0 = arith.constant 0 : i32
    return %c0_i32, %arg0 : i32, i32
  }
}

</mosaic_0001>

<llo_original>
// kernel: tpu_custom_call.1
$region0: #{tpu_custom_call.1}
  #allocation0 [shape = 'u32[]', space=smem, size = 0x4, offset = 0x4, fixed_abs, tag = 'smem constant byte address 0x4 - core index']
  #allocation1 [shape = 'u32[144,128]{1,0:T(1,128)}', space=vmem, size = 0x12000, scoped, tag = 'internal scratch']
  %s0 = inlined_call_operand.vmem [shape: f32[16,256], index: 0, kind: input, shape index: {}]
  %s1 = inlined_call_operand.vmem [shape: f32[32,16], index: 1, kind: input, shape index: {}]
  %s2 = inlined_call_operand.vmem [shape: f32[32,1], index: 2, kind: input, shape index: {}]
  %s3 = inlined_call_operand.vmem [shape: f32[32,32], index: 3, kind: input, shape index: {}]
  %s4 = inlined_call_operand.vmem [shape: f32[32,1], index: 4, kind: input, shape index: {}]
  %s5 = inlined_call_operand.vmem [shape: f32[8,32], index: 5, kind: input, shape index: {}]
  %s6 = inlined_call_operand.vmem [shape: f32[8,1], index: 6, kind: input, shape index: {}]
  %s7 = inlined_call_operand.hbm [shape: f32[8,256], index: 7, kind: output, shape index: {}]
  %s8 = sld [smem:[#allocation0]]
  $region38: #{tpu_custom_call.1} parent=0
    _
  %s10 = ssub.s32 1, %s8
  %s11 = scalar_select 0, %s10, %s8
  $region1: #{tpu_custom_call.1} parent=0
    #allocation2 [shape = 'u8[8192]{0}', space=vmem, size = 0x2000, scoped, tag = 'output window, operand 0, single buffered']
    #allocation3 [shape = 's32[1]{0}', space=sflag, size = 0x4, scoped, tag = 'scoped memory for tpu_custom_call.1']
    %12 = vsyncpa [#allocation3], 0
    // Predicated region
    $region2: #{tpu_custom_call.1} parent=1 // pred_check
      _
    $region3: #{tpu_custom_call.1} parent=1 // pred_check_branch
      %14 = sbr.rel (0) target = $region5
    $region4: #{tpu_custom_call.1} parent=1 // pred_region
      _
    $region5: #{tpu_custom_call.1} parent=1 // pred_fallthru
      _
    // Predicated region
    $region6: #{tpu_custom_call.1} parent=1 // pred_check
      _
    $region7: #{tpu_custom_call.1} parent=1 // pred_check_branch
      %16 = sbr.rel (0) target = $region9
    $region8: #{tpu_custom_call.1} parent=1 // pred_region
      _
    $region9: #{tpu_custom_call.1} parent=1 // pred_fallthru
      _
    // Predicated region
    $region10: #{tpu_custom_call.1} parent=1 // pred_check
      _
    $region11: #{tpu_custom_call.1} parent=1 // pred_check_branch
      %18 = sbr.rel (0) target = $region13
    $region12: #{tpu_custom_call.1} parent=1 // pred_region
      _
    $region13: #{tpu_custom_call.1} parent=1 // pred_fallthru
      _
    // Predicated region
    $region14: #{tpu_custom_call.1} parent=1 // pred_check
      _
    $region15: #{tpu_custom_call.1} parent=1 // pred_check_branch
      %20 = sbr.rel (0) target = $region17
    $region16: #{tpu_custom_call.1} parent=1 // pred_region
      _
    $region17: #{tpu_custom_call.1} parent=1 // pred_fallthru
      _
    // Predicated region
    $region18: #{tpu_custom_call.1} parent=1 // pred_check
      _
    $region19: #{tpu_custom_call.1} parent=1 // pred_check_branch
      %22 = sbr.rel (0) target = $region21
    $region20: #{tpu_custom_call.1} parent=1 // pred_region
      _
    $region21: #{tpu_custom_call.1} parent=1 // pred_fallthru
      _
    // Predicated region
    $region22: #{tpu_custom_call.1} parent=1 // pred_check
      _
    $region23: #{tpu_custom_call.1} parent=1 // pred_check_branch
      %24 = sbr.rel (0) target = $region25
    $region24: #{tpu_custom_call.1} parent=1 // pred_region
      _
    $region25: #{tpu_custom_call.1} parent=1 // pred_fallthru
      _
    // Predicated region
    $region26: #{tpu_custom_call.1} parent=1 // pred_check
      _
    $region27: #{tpu_custom_call.1} parent=1 // pred_check_branch
      %26 = sbr.rel (0) target = $region29
    $region28: #{tpu_custom_call.1} parent=1 // pred_region
      _
    $region29: #{tpu_custom_call.1} parent=1 // pred_fallthru
      _
    %v27 = vld [vmem:[%s0] sm:$0xff]
    %v28 = vld [vmem:[%s0 + $0x8] sm:$0xff]
    %v29 = vld [vmem:[%s0 + $0x10] sm:$0xff]
    %v30 = vld [vmem:[%s0 + $0x18] sm:$0xff]
    %v31 = vld [vmem:[%s1] sm:$0xff]
    %v32 = vld [vmem:[%s1 + $0x8] sm:$0xff]
    %v33 = vld [vmem:[%s1 + $0x10] sm:$0xff]
    %v34 = vld [vmem:[%s1 + $0x18] sm:$0xff]
    %v35 = vld [vmem:[%s2] sm:$0xff]
    %v36 = vld [vmem:[%s2 + $0x8] sm:$0xff]
    %v37 = vld [vmem:[%s2 + $0x10] sm:$0xff]
    %v38 = vld [vmem:[%s2 + $0x18] sm:$0xff]
    %40 = vset.pattern.permute.xlu0 0
    %41 = vperm.xlu0 %40, %v35
    %v42 = vpop.permute.xlu0 %41
    %45 = vset.pattern.permute.xlu0 0
    %46 = vperm.xlu0 %45, %v36
    %v47 = vpop.permute.xlu0 %46
    %50 = vset.pattern.permute.xlu0 0
    %51 = vperm.xlu0 %50, %v37
    %v52 = vpop.permute.xlu0 %51
    %55 = vset.pattern.permute.xlu0 0
    %56 = vperm.xlu0 %55, %v38
    %v57 = vpop.permute.xlu0 %56
    %vm59 = vcmask 130048
    %v61 = vsel %vm59, %v31, 0
    %v64 = vsel %vm59, %v32, 0
    %v67 = vsel %vm59, %v33, 0
    %v70 = vsel %vm59, %v34, 0
    %72 = vmatprep.subr.mxu0 %v28
    %73 = vmatpush1.msra.mxu0 %v27
    %74 = vmatprep.subr.mxu0 %v30
    %75 = vmatpush1.msra.mxu0 %v29
    %76 = vmatprep.subr.mxu0 0.0
    %77 = vmatpush1.msra.mxu0 0.0
    %78 = vmatprep.subr.mxu0 0.0
    %79 = vmatpush1.msra.mxu0 0.0
    %80 = vmatprep.subr.mxu0 0.0
    %81 = vmatpush1.msra.mxu0 0.0
    %82 = vmatprep.subr.mxu0 0.0
    %83 = vmatpush1.msra.mxu0 0.0
    %84 = vmatprep.subr.mxu0 0.0
    %85 = vmatpush1.msra.mxu0 0.0
    %86 = vmatprep.subr.mxu0 0.0
    %87 = vmatpush1.msra.mxu0 0.0
    %88 = vmatprep.subr.mxu0 0.0
    %89 = vmatpush1.msra.mxu0 0.0
    %90 = vmatprep.subr.mxu0 0.0
    %91 = vmatpush1.msra.mxu0 0.0
    %92 = vmatprep.subr.mxu0 0.0
    %93 = vmatpush1.msra.mxu0 0.0
    %94 = vmatprep.subr.mxu0 0.0
    %95 = vmatpush1.msra.mxu0 0.0
    %96 = vmatprep.subr.mxu0 0.0
    %97 = vmatpush1.msra.mxu0 0.0
    %98 = vmatprep.subr.mxu0 0.0
    %99 = vmatpush1.msra.mxu0 0.0
    %100 = vmatprep.subr.mxu0 0.0
    %101 = vmatpush1.msra.mxu0 0.0
    %102 = vmatprep.subr.mxu0 0.0
    %103 = vmatpush1.msra.mxu0 0.0
    %104 = vmatprep.subr.mxu0 0.0
    %105 = vmatpush1.msra.mxu0 0.0
    %106 = vmatprep.subr.mxu0 0.0
    %107 = vmatpush1.msra.mxu0 0.0
    %108 = vmatprep.subr.mxu0 0.0
    %109 = vmatpush1.msra.mxu0 0.0
    %110 = vmatprep.subr.mxu0 0.0
    %111 = vmatpush1.msra.mxu0 0.0
    %112 = vmatprep.subr.mxu0 0.0
    %113 = vmatpush1.msra.mxu0 0.0
    %114 = vmatprep.subr.mxu0 0.0
    %115 = vmatpush1.msra.mxu0 0.0
    %116 = vmatprep.subr.mxu0 0.0
    %117 = vmatpush1.msra.mxu0 0.0
    %118 = vmatprep.subr.mxu0 0.0
    %119 = vmatpush1.msra.mxu0 0.0
    %120 = vmatprep.subr.mxu0 0.0
    %121 = vmatpush1.msra.mxu0 0.0
    %122 = vmatprep.subr.mxu0 0.0
    %123 = vmatpush1.msra.mxu0 0.0
    %124 = vmatprep.subr.mxu0 0.0
    %125 = vmatpush1.msra.mxu0 0.0
    %126 = vmatprep.subr.mxu0 0.0
    %127 = vmatpush1.msra.mxu0 0.0
    %128 = vmatprep.subr.mxu0 0.0
    %129 = vmatpush1.msra.mxu0 0.0
    %130 = vmatprep.subr.mxu0 0.0
    %131 = vmatpush1.msra.mxu0 0.0
    %132 = vmatprep.subr.mxu0 0.0
    %133 = vmatpush1.msra.mxu0 0.0
    %134 = vmatprep.subr.mxu0 0.0
    %135 = vmatpush1.msra.mxu0 0.0
    %136 = vmatprep.mubr.f32.mxu0 0.0
    %137 = vmatmul.mubr.f32.gmra.mrb[0].mxu0 %v61
    %v138 = vpop.f32.mrb[0].mxu0
    %v139 = vadd.f32 %v42, %v138
    %v140 = vpop.f32.mrb[0].mxu0
    %v141 = vadd.f32 %v42, %v140
    %142 = vmatprep.mubr.f32.mxu0 0.0
    %143 = vmatmul.mubr.f32.gmra.mrb[0].mxu0 %v64
    %v144 = vpop.f32.mrb[0].mxu0
    %v145 = vadd.f32 %v47, %v144
    %v146 = vpop.f32.mrb[0].mxu0
    %v147 = vadd.f32 %v47, %v146
    %148 = vmatprep.mubr.f32.mxu0 0.0
    %149 = vmatmul.mubr.f32.gmra.mrb[0].mxu0 %v67
    %v150 = vpop.f32.mrb[0].mxu0
    %v151 = vadd.f32 %v52, %v150
    %v152 = vpop.f32.mrb[0].mxu0
    %v153 = vadd.f32 %v52, %v152
    %154 = vmatprep.mubr.f32.mxu0 0.0
    %155 = vmatmul.mubr.f32.gmra.mrb[0].mxu0 %v70
    %v156 = vpop.f32.mrb[0].mxu0
    %v157 = vadd.f32 %v57, %v156
    %v158 = vpop.f32.mrb[0].mxu0
    %v159 = vadd.f32 %v57, %v158
    %160 = vdwg.mxu0
    %v161 = vtanh.pop %v139
    %v162 = vtanh.pop %v141
    %v163 = vtanh.pop %v145
    %v164 = vtanh.pop %v147
    %v165 = vtanh.pop %v151
    %v166 = vtanh.pop %v153
    %v167 = vtanh.pop %v157
    %v168 = vtanh.pop %v159
    %v169 = vld [vmem:[%s3] sm:$0xff]
    %v170 = vld [vmem:[%s3 + $0x8] sm:$0xff]
    %v171 = vld [vmem:[%s3 + $0x10] sm:$0xff]
    %v172 = vld [vmem:[%s3 + $0x18] sm:$0xff]
    %v173 = vld [vmem:[%s4] sm:$0xff]
    %v174 = vld [vmem:[%s4 + $0x8] sm:$0xff]
    %v175 = vld [vmem:[%s4 + $0x10] sm:$0xff]
    %v176 = vld [vmem:[%s4 + $0x18] sm:$0xff]
    %178 = vset.pattern.permute.xlu0 0
    %179 = vperm.xlu0 %178, %v173
    %v180 = vpop.permute.xlu0 %179
    %183 = vset.pattern.permute.xlu0 0
    %184 = vperm.xlu0 %183, %v174
    %v185 = vpop.permute.xlu0 %184
    %188 = vset.pattern.permute.xlu0 0
    %189 = vperm.xlu0 %188, %v175
    %v190 = vpop.permute.xlu0 %189
    %193 = vset.pattern.permute.xlu0 0
    %194 = vperm.xlu0 %193, %v176
    %v195 = vpop.permute.xlu0 %194
    %vm197 = vcmask 261120
    %v199 = vsel %vm197, %v169, 0
    %v202 = vsel %vm197, %v170, 0
    %v205 = vsel %vm197, %v171, 0
    %v208 = vsel %vm197, %v172, 0
    %210 = vmatprep.subr.mxu0 %v162
    %211 = vmatpush1.msra.mxu0 %v161
    %212 = vmatprep.subr.mxu0 %v164
    %213 = vmatpush1.msra.mxu0 %v163
    %214 = vmatprep.subr.mxu0 %v166
    %215 = vmatpush1.msra.mxu0 %v165
    %216 = vmatprep.subr.mxu0 %v168
    %217 = vmatpush1.msra.mxu0 %v167
    %218 = vmatprep.subr.mxu0 0.0
    %219 = vmatpush1.msra.mxu0 0.0
    %220 = vmatprep.subr.mxu0 0.0
    %221 = vmatpush1.msra.mxu0 0.0
    %222 = vmatprep.subr.mxu0 0.0
    %223 = vmatpush1.msra.mxu0 0.0
    %224 = vmatprep.subr.mxu0 0.0
    %225 = vmatpush1.msra.mxu0 0.0
    %226 = vmatprep.subr.mxu0 0.0
    %227 = vmatpush1.msra.mxu0 0.0
    %228 = vmatprep.subr.mxu0 0.0
    %229 = vmatpush1.msra.mxu0 0.0
    %230 = vmatprep.subr.mxu0 0.0
    %231 = vmatpush1.msra.mxu0 0.0
    %232 = vmatprep.subr.mxu0 0.0
    %233 = vmatpush1.msra.mxu0 0.0
    %234 = vmatprep.subr.mxu0 0.0
    %235 = vmatpush1.msra.mxu0 0.0
    %236 = vmatprep.subr.mxu0 0.0
    %237 = vmatpush1.msra.mxu0 0.0
    %238 = vmatprep.subr.mxu0 0.0
    %239 = vmatpush1.msra.mxu0 0.0
    %240 = vmatprep.subr.mxu0 0.0
    %241 = vmatpush1.msra.mxu0 0.0
    %242 = vmatprep.subr.mxu0 0.0
    %243 = vmatpush1.msra.mxu0 0.0
    %244 = vmatprep.subr.mxu0 0.0
    %245 = vmatpush1.msra.mxu0 0.0
    %246 = vmatprep.subr.mxu0 0.0
    %247 = vmatpush1.msra.mxu0 0.0
    %248 = vmatprep.subr.mxu0 0.0
    %249 = vmatpush1.msra.mxu0 0.0
    %250 = vmatprep.subr.mxu0 0.0
    %251 = vmatpush1.msra.mxu0 0.0
    %252 = vmatprep.subr.mxu0 0.0
    %253 = vmatpush1.msra.mxu0 0.0
    %254 = vmatprep.subr.mxu0 0.0
    %255 = vmatpush1.msra.mxu0 0.0
    %256 = vmatprep.subr.mxu0 0.0
    %257 = vmatpush1.msra.mxu0 0.0
    %258 = vmatprep.subr.mxu0 0.0
    %259 = vmatpush1.msra.mxu0 0.0
    %260 = vmatprep.subr.mxu0 0.0
    %261 = vmatpush1.msra.mxu0 0.0
    %262 = vmatprep.subr.mxu0 0.0
    %263 = vmatpush1.msra.mxu0 0.0
    %264 = vmatprep.subr.mxu0 0.0
    %265 = vmatpush1.msra.mxu0 0.0
    %266 = vmatprep.subr.mxu0 0.0
    %267 = vmatpush1.msra.mxu0 0.0
    %268 = vmatprep.subr.mxu0 0.0
    %269 = vmatpush1.msra.mxu0 0.0
    %270 = vmatprep.subr.mxu0 0.0
    %271 = vmatpush1.msra.mxu0 0.0
    %272 = vmatprep.subr.mxu0 0.0
    %273 = vmatpush1.msra.mxu0 0.0
    %274 = vmatprep.mubr.f32.mxu0 0.0
    %275 = vmatmul.mubr.f32.gmra.mrb[0].mxu0 %v199
    %v276 = vpop.f32.mrb[0].mxu0
    %v277 = vadd.f32 %v180, %v276
    %v278 = vpop.f32.mrb[0].mxu0
    %v279 = vadd.f32 %v180, %v278
    %280 = vmatprep.mubr.f32.mxu0 0.0
    %281 = vmatmul.mubr.f32.gmra.mrb[0].mxu0 %v202
    %v282 = vpop.f32.mrb[0].mxu0
    %v283 = vadd.f32 %v185, %v282
    %v284 = vpop.f32.mrb[0].mxu0
    %v285 = vadd.f32 %v185, %v284
    %286 = vmatprep.mubr.f32.mxu0 0.0
    %287 = vmatmul.mubr.f32.gmra.mrb[0].mxu0 %v205
    %v288 = vpop.f32.mrb[0].mxu0
    %v289 = vadd.f32 %v190, %v288
    %v290 = vpop.f32.mrb[0].mxu0
    %v291 = vadd.f32 %v190, %v290
    %292 = vmatprep.mubr.f32.mxu0 0.0
    %293 = vmatmul.mubr.f32.gmra.mrb[0].mxu0 %v208
    %v294 = vpop.f32.mrb[0].mxu0
    %v295 = vadd.f32 %v195, %v294
    %v296 = vpop.f32.mrb[0].mxu0
    %v297 = vadd.f32 %v195, %v296
    %298 = vdwg.mxu0
    %v299 = vtanh.pop %v277
    %v300 = vtanh.pop %v279
    %v301 = vtanh.pop %v283
    %v302 = vtanh.pop %v285
    %v303 = vtanh.pop %v289
    %v304 = vtanh.pop %v291
    %v305 = vtanh.pop %v295
    %v306 = vtanh.pop %v297
    %v307 = vld [vmem:[%s5] sm:$0xff]
    %v308 = vld [vmem:[%s6] sm:$0xff]
    %310 = vset.pattern.permute.xlu0 0
    %311 = vperm.xlu0 %310, %v308
    %v312 = vpop.permute.xlu0 %311
    %v315 = vsel %vm197, %v307, 0
    %317 = vmatprep.subr.mxu0 %v300
    %318 = vmatpush1.msra.mxu0 %v299
    %319 = vmatprep.subr.mxu0 %v302
    %320 = vmatpush1.msra.mxu0 %v301
    %321 = vmatprep.subr.mxu0 %v304
    %322 = vmatpush1.msra.mxu0 %v303
    %323 = vmatprep.subr.mxu0 %v306
    %324 = vmatpush1.msra.mxu0 %v305
    %325 = vmatprep.subr.mxu0 0.0
    %326 = vmatpush1.msra.mxu0 0.0
    %327 = vmatprep.subr.mxu0 0.0
    %328 = vmatpush1.msra.mxu0 0.0
    %329 = vmatprep.subr.mxu0 0.0
    %330 = vmatpush1.msra.mxu0 0.0
    %331 = vmatprep.subr.mxu0 0.0
    %332 = vmatpush1.msra.mxu0 0.0
    %333 = vmatprep.subr.mxu0 0.0
    %334 = vmatpush1.msra.mxu0 0.0
    %335 = vmatprep.subr.mxu0 0.0
    %336 = vmatpush1.msra.mxu0 0.0
    %337 = vmatprep.subr.mxu0 0.0
    %338 = vmatpush1.msra.mxu0 0.0
    %339 = vmatprep.subr.mxu0 0.0
    %340 = vmatpush1.msra.mxu0 0.0
    %341 = vmatprep.subr.mxu0 0.0
    %342 = vmatpush1.msra.mxu0 0.0
    %343 = vmatprep.subr.mxu0 0.0
    %344 = vmatpush1.msra.mxu0 0.0
    %345 = vmatprep.subr.mxu0 0.0
    %346 = vmatpush1.msra.mxu0 0.0
    %347 = vmatprep.subr.mxu0 0.0
    %348 = vmatpush1.msra.mxu0 0.0
    %349 = vmatprep.subr.mxu0 0.0
    %350 = vmatpush1.msra.mxu0 0.0
    %351 = vmatprep.subr.mxu0 0.0
    %352 = vmatpush1.msra.mxu0 0.0
    %353 = vmatprep.subr.mxu0 0.0
    %354 = vmatpush1.msra.mxu0 0.0
    %355 = vmatprep.subr.mxu0 0.0
    %356 = vmatpush1.msra.mxu0 0.0
    %357 = vmatprep.subr.mxu0 0.0
    %358 = vmatpush1.msra.mxu0 0.0
    %359 = vmatprep.subr.mxu0 0.0
    %360 = vmatpush1.msra.mxu0 0.0
    %361 = vmatprep.subr.mxu0 0.0
    %362 = vmatpush1.msra.mxu0 0.0
    %363 = vmatprep.subr.mxu0 0.0
    %364 = vmatpush1.msra.mxu0 0.0
    %365 = vmatprep.subr.mxu0 0.0
    %366 = vmatpush1.msra.mxu0 0.0
    %367 = vmatprep.subr.mxu0 0.0
    %368 = vmatpush1.msra.mxu0 0.0
    %369 = vmatprep.subr.mxu0 0.0
    %370 = vmatpush1.msra.mxu0 0.0
    %371 = vmatprep.subr.mxu0 0.0
    %372 = vmatpush1.msra.mxu0 0.0
    %373 = vmatprep.subr.mxu0 0.0
    %374 = vmatpush1.msra.mxu0 0.0
    %375 = vmatprep.subr.mxu0 0.0
    %376 = vmatpush1.msra.mxu0 0.0
    %377 = vmatprep.subr.mxu0 0.0
    %378 = vmatpush1.msra.mxu0 0.0
    %379 = vmatprep.subr.mxu0 0.0
    %380 = vmatpush1.msra.mxu0 0.0
    %381 = vmatprep.mubr.f32.mxu0 0.0
    %382 = vmatmul.mubr.f32.gmra.mrb[0].mxu0 %v315
    %v383 = vpop.f32.mrb[0].mxu0
    %v384 = vadd.f32 %v312, %v383
    %v385 = vpop.f32.mrb[0].mxu0
    %v386 = vadd.f32 %v312, %v385
    %387 = vdwg.mxu0
    %388 = vst [vmem:[#allocation2] sm:$0xff] %v384
    %389 = vst [vmem:[#allocation2 + $0x8] sm:$0xff] %v386
    // Predicated region
    $region30: #{tpu_custom_call.1} parent=1 // pred_check
      _
    $region31: #{tpu_custom_call.1} parent=1 // pred_check_branch
      %391 = sbr.rel (0) target = $region33
    $region32: #{tpu_custom_call.1} parent=1 // pred_region
      %s393 = ssub.s32 256, 256
      %394 = vsyncadd [#allocation3], %s393
      %s396 = sshll.u32 [#allocation2], 4
      %s397 = int_to_ptr.vmem [resolvable:$true] %s396
      %399 = dma.vmem_to_hbm [thread:$0]  %s397, 256, %s7, [#allocation3]
    $region33: #{tpu_custom_call.1} parent=1 // pred_fallthru
      _
    // Predicated region
    $region34: #{tpu_custom_call.1} parent=1 // pred_check
      _
    $region35: #{tpu_custom_call.1} parent=1 // pred_check_branch
      %401 = sbr.rel (0) target = $region37
    $region36: #{tpu_custom_call.1} parent=1 // pred_region
      %402 = dma.done [#allocation3], 256
    $region37: #{tpu_custom_call.1} parent=1 // pred_fallthru
      _
    %403 = vsyncpa [#allocation3], 1

</llo_original>
